<compile_context>
chip_gen: v7x
topology: tpu7x:2x2x1
jax: 0.10.0
libtpu: 0.0.40
codegen_flags: <defaults>
</compile_context>

<pallas_src>
import functools
import math

import jax
import jax.numpy as jnp
from jax.experimental import pallas as pl
from jax.experimental.pallas import tpu as pltpu


_MASK_VALUE = -1e30  # large finite negative (avoids -inf arithmetic)
# Comfortable for the chosen tiles; leaves headroom below v7x's 64 MiB VMEM.
_VMEM_LIMIT_BYTES = 48 * 1024 * 1024


def _sublane_granule(dtype):
    """Sublane packing granule: 8 for 32-bit, 16 for bf16, 32 for 8-bit."""
    return max(8, 32 // jnp.dtype(dtype).itemsize)


def _pick_tile(dim, target, granule):
    """Largest multiple of `granule` that divides `dim` and is <= target."""
    assert dim % granule == 0, (dim, granule)
    t = max(granule, min(target, dim))
    t -= t % granule
    while dim % t:
        t -= granule
    return t


# ----------------------------------------------------------------------------
# Kernels
# ----------------------------------------------------------------------------
def _rope_kernel(x_ref, cos_ref, sin_ref, o_ref, *, head_dim, scale):
    """RoPE on one (batch, head, seq-tile) block. `sin_ref` is sign-folded."""
    x = x_ref[...].astype(jnp.float32)                    # (ts, D)
    rot = pltpu.roll(x, shift=head_dim // 2, axis=1)      # [x2, x1]
    y = x * cos_ref[...] + rot * sin_ref[...]
    if scale != 1.0:
        y = y * scale
    o_ref[...] = y.astype(o_ref.dtype)


def _flash_attention_kernel(q_ref, k_ref, v_ref, o_ref,
                            m_sc, l_sc, acc_sc,
                            *, tq, tk, groups, head_dim, approx_recip):
    """Flash attention over one (batch, kv-head, q-tile); kv-tile is axis 3.

    q_ref / o_ref hold all `groups` query heads that share this kv head:
    shape (tq, groups*head_dim); k_ref / v_ref are (tk, head_dim).
    """
    qi = pl.program_id(2)
    ki = pl.program_id(3)
    q_start = qi * tq
    k_start = ki * tk
    diag_block = (q_start + tq - 1) // tk   # last kv block with any valid col

    @pl.when(ki == 0)
    def _init():
        m_sc[...] = jnp.full_like(m_sc, _MASK_VALUE)
        l_sc[...] = jnp.zeros_like(l_sc)
        acc_sc[...] = jnp.zeros_like(acc_sc)

    def _step(masked):
        k_blk = k_ref[...]
        v_blk = v_ref[...]
        if masked:
            row = q_start + jax.lax.broadcasted_iota(jnp.int32, (tq, tk), 0)
            col = k_start + jax.lax.broadcasted_iota(jnp.int32, (tq, tk), 1)
            keep = row >= col
        for g in range(groups):                       # static unroll
            sl = slice(g * head_dim, (g + 1) * head_dim)
            s = jax.lax.dot_general(                  # (tq, tk) scores
                q_ref[:, sl], k_blk, (((1,), (1,)), ((), ())),
                preferred_element_type=jnp.float32)
            if masked:
                s = jnp.where(keep, s, _MASK_VALUE)
            m_prev = m_sc[g]
            m_new = jnp.maximum(m_prev, jnp.max(s, axis=-1, keepdims=True))
            alpha = jnp.exp(m_prev - m_new)
            p = jnp.exp(s - m_new)
            l_sc[g] = alpha * l_sc[g] + jnp.sum(p, axis=-1, keepdims=True)
            acc_sc[:, sl] = alpha * acc_sc[:, sl] + jnp.dot(
                p.astype(v_blk.dtype), v_blk,
                preferred_element_type=jnp.float32)
            m_sc[g] = m_new

    # Fully-below-diagonal block: skip all mask math.
    @pl.when(k_start + tk - 1 <= q_start)
    def _full():
        _step(masked=False)

    # Block straddling the causal diagonal: masked path.
    @pl.when((k_start + tk - 1 > q_start) & (k_start <= q_start + tq - 1))
    def _partial():
        _step(masked=True)

    # Finalize at the last *valid* kv block (later blocks are fully masked
    # and their K/V DMA is clamped away by the index map).
    @pl.when(ki == diag_block)
    def _finalize():
        for g in range(groups):
            sl = slice(g * head_dim, (g + 1) * head_dim)
            inv_l = pl.reciprocal(l_sc[g], approx=approx_recip)
            o_ref[:, sl] = (acc_sc[:, sl] * inv_l).astype(o_ref.dtype)


def _o_proj_kernel(x_ref, w_ref, o_ref, acc_ref):
    @pl.when(pl.program_id(2) == 0)
    def _():
        acc_ref[...] = jnp.zeros_like(acc_ref)
    # x (tm, tk) contracted with w (tn, tk) on in_features: no weight transpose.
    acc_ref[...] += jax.lax.dot_general(
        x_ref[...], w_ref[...], (((1,), (1,)), ((), ())),
        preferred_element_type=jnp.float32)

    @pl.when(pl.program_id(2) == pl.num_programs(2) - 1)
    def _():
        o_ref[...] = acc_ref[...].astype(o_ref.dtype)


def _o_proj_residual_kernel(x_ref, w_ref, res_ref, o_ref, acc_ref):
    @pl.when(pl.program_id(2) == 0)
    def _():
        acc_ref[...] = jnp.zeros_like(acc_ref)
    acc_ref[...] += jax.lax.dot_general(
        x_ref[...], w_ref[...], (((1,), (1,)), ((), ())),
        preferred_element_type=jnp.float32)

    @pl.when(pl.program_id(2) == pl.num_programs(2) - 1)
    def _():
        o_ref[...] = (acc_ref[...] + res_ref[...].astype(jnp.float32)
                      ).astype(o_ref.dtype)


# ----------------------------------------------------------------------------
# Wrappers
# ----------------------------------------------------------------------------
def _rope_pallas(x, cos, sin_signed, *, num_heads, head_dim, scale=1.0,
                 seq_tile=512):
    """Apply RoPE to every head of x=(B, S, num_heads*head_dim)."""
    B, S, _ = x.shape
    ts = _pick_tile(S, seq_tile, _sublane_granule(x.dtype))
    if cos.ndim == 2:   # shared (S, D) table (1-D position_ids / prefill)
        tab_spec = pl.BlockSpec((ts, head_dim), lambda b, h, si: (si, 0))
    else:               # per-batch (B, S, D) table
        tab_spec = pl.BlockSpec((None, ts, head_dim),
                                lambda b, h, si: (b, si, 0))
    kernel = functools.partial(_rope_kernel, head_dim=head_dim, scale=scale)
    return pl.pallas_call(
        kernel,
        out_shape=jax.ShapeDtypeStruct(x.shape, x.dtype),
        grid=(B, num_heads, S // ts),
        in_specs=[
            pl.BlockSpec((None, ts, head_dim), lambda b, h, si: (b, si, h)),
            tab_spec,
            tab_spec,
        ],
        out_specs=pl.BlockSpec((None, ts, head_dim), lambda b, h, si: (b, si, h)),
        compiler_params=pltpu.CompilerParams(
            dimension_semantics=("parallel", "parallel", "parallel"),
            vmem_limit_bytes=_VMEM_LIMIT_BYTES),
    )(x, cos, sin_signed)


def mui_flash_attention(q_roped, k_roped, v, *,
                        num_heads, num_kv_heads, head_dim,
                        q_tile=512, kv_tile=512):
    """Causal GQA attention; output in (B, S, num_heads*head_dim) layout.

    q_roped must already have RoPE and the 1/sqrt(head_dim) scale applied.
    """
    B, S, _ = q_roped.shape
    groups = num_heads // num_kv_heads
    tq = _pick_tile(S, q_tile, _sublane_granule(q_roped.dtype))
    tk = _pick_tile(S, kv_tile, _sublane_granule(k_roped.dtype))

    def kv_index_map(b, g, qi, ki):
        # Clamp to the causal diagonal: kv blocks above the diagonal map to
        # the diagonal block, so the pipeline never re-DMAs masked K/V tiles.
        return (b, jnp.minimum(ki, (qi * tq + tq - 1) // tk), g)

    kernel = functools.partial(
        _flash_attention_kernel, tq=tq, tk=tk, groups=groups,
        head_dim=head_dim,
        approx_recip=(q_roped.dtype != jnp.float32))

    return pl.pallas_call(
        kernel,
        out_shape=jax.ShapeDtypeStruct((B, S, num_heads * head_dim),
                                       q_roped.dtype),
        grid=(B, num_kv_heads, S // tq, S // tk),
        in_specs=[
            pl.BlockSpec((None, tq, groups * head_dim),
                         lambda b, g, qi, ki: (b, qi, g)),
            pl.BlockSpec((None, tk, head_dim), kv_index_map),
            pl.BlockSpec((None, tk, head_dim), kv_index_map),
        ],
        out_specs=pl.BlockSpec((None, tq, groups * head_dim),
                               lambda b, g, qi, ki: (b, qi, g)),
        scratch_shapes=[
            pltpu.VMEM((groups, tq, 1), jnp.float32),          # running max
            pltpu.VMEM((groups, tq, 1), jnp.float32),          # running sum
            pltpu.VMEM((tq, groups * head_dim), jnp.float32),  # output acc
        ],
        compiler_params=pltpu.CompilerParams(
            dimension_semantics=("parallel", "parallel", "parallel",
                                 "arbitrary"),
            vmem_limit_bytes=_VMEM_LIMIT_BYTES),
    )(q_roped, k_roped, v)


def mui_o_proj(x2d, w, res2d=None, *, tm=512, tn=512, tk=512):
    """o_proj: x @ w^T (+ residual), w given in torch (out, in) layout."""
    M, K = x2d.shape
    N = w.shape[0]
    assert w.shape[1] == K
    tm = _pick_tile(M, tm, _sublane_granule(x2d.dtype))
    tn = _pick_tile(N, tn, 128)
    tk = _pick_tile(K, tk, 128)
    grid = (M // tm, N // tn, K // tk)

    common = dict(
        out_shape=jax.ShapeDtypeStruct((M, N), x2d.dtype),
        grid=grid,
        out_specs=pl.BlockSpec((tm, tn), lambda i, j, k: (i, j)),
        scratch_shapes=[pltpu.VMEM((tm, tn), jnp.float32)],
        compiler_params=pltpu.CompilerParams(
            dimension_semantics=("parallel", "parallel", "arbitrary"),
            vmem_limit_bytes=_VMEM_LIMIT_BYTES),
    )
    x_spec = pl.BlockSpec((tm, tk), lambda i, j, k: (i, k))
    w_spec = pl.BlockSpec((tn, tk), lambda i, j, k: (j, k))

    if res2d is None:
        return pl.pallas_call(_o_proj_kernel,
                              in_specs=[x_spec, w_spec], **common)(x2d, w)
    res_spec = pl.BlockSpec((tm, tn), lambda i, j, k: (i, j))
    return pl.pallas_call(_o_proj_residual_kernel,
                          in_specs=[x_spec, w_spec, res_spec],
                          **common)(x2d, w, res2d)


def mui_mistral_attention_forward(query_states, key_states, value_states,
                                  position_ids, o_proj_weight, *,
                                  num_heads, num_kv_heads, head_dim,
                                  rope_theta, residual=None,
                                  q_tile=512, kv_tile=512):
    """Causal prefill path of MuiMistralAttention.forward."""
    # TODO(synk): past_key_value (KV cache), additive attention_mask (padding /
    # sliding window), attention_dropout and output_attentions are not
    # implemented; the causal mask is generated in-kernel (is_causal=True).
    B, S, hidden = query_states.shape
    assert hidden == num_heads * head_dim
    assert num_heads % num_kv_heads == 0
    assert head_dim % 128 == 0, "head_dim must be a multiple of 128 (lane dim)"

    # Rotary tables in f32 (matches MuiMistralRotaryEmbedding); rotate_half's
    # sign is folded into the sin table so the kernels need one roll + 2 FMAs.
    # For 1-D position_ids the tables are (S, D) (no batch dim streamed).
    inv_freq = 1.0 / (rope_theta ** (
        jnp.arange(0, head_dim, 2, dtype=jnp.float32) / head_dim))
    if position_ids.ndim == 1:
        freqs = position_ids.astype(jnp.float32)[:, None] * inv_freq   # (S,D/2)
    else:
        freqs = position_ids.astype(jnp.float32)[..., None] * inv_freq  # (B,S,D/2)
    cos = jnp.cos(jnp.concatenate([freqs, freqs], axis=-1))
    sin_half = jnp.sin(freqs)
    sin_signed = jnp.concatenate([-sin_half, sin_half], axis=-1)

    # RoPE pre-passes: Q carries the 1/sqrt(D) softmax scale.
    scale = 1.0 / math.sqrt(head_dim)
    q_roped = _rope_pallas(query_states, cos, sin_signed,
                           num_heads=num_heads, head_dim=head_dim, scale=scale)
    k_roped = _rope_pallas(key_states, cos, sin_signed,
                           num_heads=num_kv_heads, head_dim=head_dim)

    attn = mui_flash_attention(q_roped, k_roped, value_states,
                               num_heads=num_heads, num_kv_heads=num_kv_heads,
                               head_dim=head_dim,
                               q_tile=q_tile, kv_tile=kv_tile)   # (B,S,H*D)

    out2d = mui_o_proj(
        attn.reshape(B * S, hidden), o_proj_weight,
        None if residual is None else residual.reshape(B * S, -1))
    return out2d.reshape(B, S, o_proj_weight.shape[0])


# ----------------------------------------------------------------------------
# Pure-JAX reference (mirrors the PyTorch forward) for verification
# ----------------------------------------------------------------------------
def reference_forward(q, k, v, pos_ids, w, *, H, Hkv, D, theta, residual):
    B, S, _ = q.shape
    groups = H // Hkv
    hi = jax.lax.Precision.HIGHEST
    qh = q.reshape(B, S, H, D).transpose(0, 2, 1, 3)
    kh = k.reshape(B, S, Hkv, D).transpose(0, 2, 1, 3)
    vh = v.reshape(B, S, Hkv, D).transpose(0, 2, 1, 3)

    if pos_ids.ndim == 1:
        pos_ids = jnp.broadcast_to(pos_ids[None, :], (B, S))
    inv_freq = 1.0 / (theta ** (jnp.arange(0, D, 2, dtype=jnp.float32) / D))
    freqs = pos_ids.astype(jnp.float32)[..., None] * inv_freq
    emb = jnp.concatenate([freqs, freqs], axis=-1)
    cos, sin = jnp.cos(emb)[:, None], jnp.sin(emb)[:, None]          # (B,1,S,D)

    def rot_half(x):
        x1, x2 = x[..., :D // 2], x[..., D // 2:]
        return jnp.concatenate([-x2, x1], axis=-1)

    qh = qh * cos + rot_half(qh) * sin
    kh = kh * cos + rot_half(kh) * sin
    kh = jnp.repeat(kh, groups, axis=1)
    vh = jnp.repeat(vh, groups, axis=1)

    scores = jnp.einsum("bhqd,bhkd->bhqk", qh, kh, precision=hi) / math.sqrt(D)
    causal = jnp.tril(jnp.ones((S, S), jnp.bool_))
    scores = jnp.where(causal[None, None], scores, -1e30)
    p = jax.nn.softmax(scores.astype(jnp.float32), axis=-1).astype(q.dtype)
    attn = jnp.einsum("bhqk,bhkd->bhqd", p, vh, precision=hi)
    attn = attn.transpose(0, 2, 1, 3).reshape(B, S, H * D)
    out = jnp.einsum("bsk,nk->bsn", attn, w, precision=hi)
    if residual is not None:
        out = out + residual
    return out


# ----------------------------------------------------------------------------
if __name__ == "__main__":
    # Small Mistral-like config (head_dim kept at 128 for lane alignment).
    # S=256 with q_tile=128 / kv_tile=64 exercises full, partial (diagonal)
    # and fully-masked (DMA-clamped, skipped) kv blocks, early finalize and
    # GQA head packing (groups=2).
    B, S = 2, 256
    num_heads, num_kv_heads, head_dim = 4, 2, 128
    hidden = num_heads * head_dim            # 512
    kv_hidden = num_kv_heads * head_dim      # 256
    rope_theta = 10000.0

    key = jax.random.PRNGKey(0)
    k_q, k_k, k_v, k_w, k_r = jax.random.split(key, 5)
    q = jax.random.normal(k_q, (B, S, hidden), jnp.float32)
    k = jax.random.normal(k_k, (B, S, kv_hidden), jnp.float32)
    v = jax.random.normal(k_v, (B, S, kv_hidden), jnp.float32)
    o_w = jax.random.normal(k_w, (hidden, hidden), jnp.float32) * 0.05  # (out, in)
    residual = jax.random.normal(k_r, (B, S, hidden), jnp.float32)
    position_ids = jnp.arange(S, dtype=jnp.int32)

    # With-residual path.
    out = mui_mistral_attention_forward(
        q, k, v, position_ids, o_w,
        num_heads=num_heads, num_kv_heads=num_kv_heads, head_dim=head_dim,
        rope_theta=rope_theta, residual=residual,
        q_tile=128, kv_tile=64)
    out = jax.block_until_ready(out)
    ref = reference_forward(q, k, v, position_ids, o_w,
                            H=num_heads, Hkv=num_kv_heads, D=head_dim,
                            theta=rope_theta, residual=residual)
    assert out.shape == (B, S, hidden)
    # Tolerance accommodates MXU f32 multi-pass matmul vs XLA HIGHEST einsums.
    assert jnp.allclose(out, ref, atol=2e-3, rtol=2e-3), \
        float(jnp.max(jnp.abs(out - ref)))

    # No-residual path (exercises the residual-free o_proj kernel) with the
    # default (large) tiles, which clamp down to S.
    out_nr = mui_mistral_attention_forward(
        q, k, v, position_ids, o_w,
        num_heads=num_heads, num_kv_heads=num_kv_heads, head_dim=head_dim,
        rope_theta=rope_theta, residual=None)
    out_nr = jax.block_until_ready(out_nr)
    ref_nr = reference_forward(q, k, v, position_ids, o_w,
                               H=num_heads, Hkv=num_kv_heads, D=head_dim,
                               theta=rope_theta, residual=None)
    assert jnp.allclose(out_nr, ref_nr, atol=2e-3, rtol=2e-3), \
        float(jnp.max(jnp.abs(out_nr - ref_nr)))

    print("KERNEL_OK")
</pallas_src>

<mosaic_0001>
module attributes {stable_mosaic.version = 11 : i64} {
  func.func @_rope_kernel(%arg0: i32, %arg1: i32, %arg2: i32, %arg3: memref<1x256x128xf32, #tpu.memory_space<vmem>>, %arg4: memref<256x128xf32, #tpu.memory_space<vmem>>, %arg5: memref<256x128xf32, #tpu.memory_space<vmem>>, %arg6: memref<1x256x128xf32, #tpu.memory_space<vmem>>) attributes {dimension_semantics = [#tpu.dimension_semantics<parallel>, #tpu.dimension_semantics<parallel>, #tpu.dimension_semantics<parallel>], iteration_bounds = array<i64: 2, 4, 1>, scalar_prefetch = 0 : i64, scratch_operands = 0 : i64, tpu.core_type = #tpu.core_type<tc>, window_params = [{transform_indices = @transform_0, window_bounds = array<i64: 1, 256, 128>}, {transform_indices = @transform_1, window_bounds = array<i64: 256, 128>}, {transform_indices = @transform_2, window_bounds = array<i64: 256, 128>}, {transform_indices = @transform_3, window_bounds = array<i64: 1, 256, 128>}]} {
    %c0 = arith.constant 0 : index
    %c0_0 = arith.constant 0 : index
    %c0_1 = arith.constant 0 : index
    %0 = vector.load %arg3[%c0, %c0_0, %c0_1] : memref<1x256x128xf32, #tpu.memory_space<vmem>>, vector<1x256x128xf32>
    %1 = vector.shape_cast %0 : vector<1x256x128xf32> to vector<256x128xf32>
    %c64_i32 = arith.constant 64 : i32
    %2 = tpu.dynamic_rotate %1 by %c64_i32 dim 1 : vector<256x128xf32>, i32 -> vector<256x128xf32>
    %c0_2 = arith.constant 0 : index
    %c0_3 = arith.constant 0 : index
    %3 = vector.load %arg4[%c0_2, %c0_3] : memref<256x128xf32, #tpu.memory_space<vmem>>, vector<256x128xf32>
    %4 = arith.mulf %1, %3 : vector<256x128xf32>
    %c0_4 = arith.constant 0 : index
    %c0_5 = arith.constant 0 : index
    %5 = vector.load %arg5[%c0_4, %c0_5] : memref<256x128xf32, #tpu.memory_space<vmem>>, vector<256x128xf32>
    %6 = arith.mulf %2, %5 : vector<256x128xf32>
    %7 = arith.addf %4, %6 : vector<256x128xf32>
    %cst = arith.constant 0.0883883461 : f32
    %8 = vector.broadcast %cst : f32 to vector<256x128xf32>
    %9 = arith.mulf %7, %8 : vector<256x128xf32>
    %c0_6 = arith.constant 0 : index
    %c0_7 = arith.constant 0 : index
    %c0_8 = arith.constant 0 : index
    %10 = vector.load %arg6[%c0_6, %c0_7, %c0_8] : memref<1x256x128xf32, #tpu.memory_space<vmem>>, vector<1x256x128xf32>
    %11 = vector.shape_cast %10 : vector<1x256x128xf32> to vector<256x128xf32>
    %12 = vector.shape_cast %9 : vector<256x128xf32> to vector<1x256x128xf32>
    tpu.vector_store %arg6[%c0_6, %c0_7, %c0_8], %12 {strides = array<i32>} : memref<1x256x128xf32, #tpu.memory_space<vmem>>, vector<1x256x128xf32>,
    return
  }
  func.func @transform_0(%arg0: i32, %arg1: i32, %arg2: i32) -> (i32, i32, i32) {
    %c0_i32 = arith.constant 0 : i32
    return %arg0, %arg2, %arg1 : i32, i32, i32
  }
  func.func @transform_1(%arg0: i32, %arg1: i32, %arg2: i32) -> (i32, i32) {
    %c0_i32 = arith.constant 0 : i32
    %c0_i32_0 = arith.constant 0 : i32
    return %arg2, %c0_i32 : i32, i32
  }
  func.func @transform_2(%arg0: i32, %arg1: i32, %arg2: i32) -> (i32, i32) {
    %c0_i32 = arith.constant 0 : i32
    %c0_i32_0 = arith.constant 0 : i32
    return %arg2, %c0_i32 : i32, i32
  }
  func.func @transform_3(%arg0: i32, %arg1: i32, %arg2: i32) -> (i32, i32, i32) {
    %c0_i32 = arith.constant 0 : i32
    return %arg0, %arg2, %arg1 : i32, i32, i32
  }
}

</mosaic_0001>

<llo_original>
// kernel: tpu_custom_call.1
$region0: #{tpu_custom_call.1}
  #allocation0 [shape = 'u32[]', space=smem, size = 0x4, offset = 0x4, fixed_abs, tag = 'smem constant byte address 0x4 - core index']
  #allocation1 [shape = 'u32[144,128]{1,0:T(1,128)}', space=vmem, size = 0x12000, scoped, tag = 'internal scratch']
  %s0 = inlined_call_operand.hbm [shape: f32[2,256,512], index: 0, kind: input, shape index: {}]
  %s1 = inlined_call_operand.hbm [shape: f32[256,128], index: 1, kind: input, shape index: {}]
  %s2 = inlined_call_operand.hbm [shape: f32[256,128], index: 2, kind: input, shape index: {}]
  %s3 = inlined_call_operand.hbm [shape: f32[2,256,512], index: 3, kind: output, shape index: {}]
  %s4 = sld [smem:[#allocation0]]
  $region57: #{tpu_custom_call.1} parent=0
    _
  %s6 = ssub.s32 1, %s4
  %s7 = scalar_select 0, %s6, %s4
  $region1: #{tpu_custom_call.1} parent=0
    #allocation2 [shape = 'u8[262144]{0}', space=vmem, size = 0x40000, scoped, tag = 'input window, operand 0']
    #allocation3 [shape = 's32[2]{0}', space=sflag, size = 0x8, scoped, tag = 'scoped memory for tpu_custom_call.1']
    #allocation4 [shape = 's32[2]{0}', space=sflag, size = 0x8, scoped, tag = 'scoped memory for tpu_custom_call.1']
    #allocation5 [shape = 'u8[131072]{0}', space=vmem, size = 0x20000, scoped, tag = 'input window, operand 1, single buffered']
    #allocation6 [shape = 's32[1]{0}', space=sflag, size = 0x4, scoped, tag = 'scoped memory for tpu_custom_call.1']
    #allocation7 [shape = 'u8[131072]{0}', space=vmem, size = 0x20000, scoped, tag = 'input window, operand 2, single buffered']
    #allocation8 [shape = 'u8[262144]{0}', space=vmem, size = 0x40000, scoped, tag = 'output window, operand 0']
    %8 = vsyncpa [#allocation3], 0
    %s9 = scalar_lea.sflag [#allocation3], 1
    %10 = vsyncpa %s9, 0
    %11 = vsyncpa [#allocation6], 0
    %12 = vsyncpa [#allocation4], 0
    %s13 = scalar_lea.sflag [#allocation4], 1
    %14 = vsyncpa %s13, 0
    loop: start=0, step=1, limit=10
    $region2: #{tpu_custom_call.1} parent=1 // loop_pre_header
      _
    $region3: #{tpu_custom_call.1} parent=1 // loop_header
      %s16 = sphi 0, %s20
      %p17 = scmp.ge.s32.totalorder %s16, 10
      %s23 = sphi 0, %s42
      %s24 = sphi 0, %s38
      %s25 = sphi 0, %s34
      %s26 = sphi 0, %s23
      %s27 = sphi 0, %s24
      %s28 = sphi 0, %s25
      %s29 = sphi 0, %s26
      %s30 = sphi 0, %s27
      %s31 = sphi 0, %s28
      %s49 = sphi 0, %s51
      %s52 = sphi 0, %s49
      %s53 = sphi 0, %s52
      %s69 = sphi 0, %s53
      %s75 = sphi 0, %s77
      %s78 = sphi 0, %s75
      %s79 = sphi 0, %s78
      %s95 = sphi 0, %s79
      %s101 = sphi 0, %s103
      %s104 = sphi 0, %s101
      %s105 = sphi 0, %s104
      %s121 = sphi 0, %s105
      %s131 = sphi 0, %s133
      %s134 = sphi 0, %s131
      %s135 = sphi 0, %s134
      %s151 = sphi 0, %s135
    $region4: #{tpu_custom_call.1} parent=1 // loop_header_branch
      %19 = sbr.rel (%p17) target = $region8
    $region5: #{tpu_custom_call.1} parent=1 // loop_body
      %s21 = ssub.s32 %s16, 1
      %s22 = ssub.s32 %s16, 2
      %s32 = sadd.s32 1, %s25
      %p33 = scmp.ge.s32.totalorder %s32, 1
      %s34 = scalar_select %p33, 0, %s32
      %s35 = sadd.s32 1, %s24
      %s36 = scalar_select %p33, %s35, %s24
      %p37 = scmp.ge.s32.totalorder %s36, 4
      %s38 = scalar_select %p37, 0, %s36
      %s39 = sadd.s32 1, %s23
      %s40 = scalar_select %p37, %s39, %s23
      %p41 = scmp.ge.s32.totalorder %s40, 2
      %s42 = scalar_select %p41, 0, %s40
      %s43 = ssub.s32 %s23, %s42
      %s44 = ssub.s32 %s25, %s34
      %s45 = sor.u32 %s43, %s44
      %s46 = ssub.s32 %s24, %s38
      %s47 = sor.u32 %s45, %s46
      %p48 = scmp.eq.s32.totalorder %s47, 0
      %s50 = sadd.s32 %s49, 1
      %s51 = scalar_select %p48, %s49, %s50
      %p54 = pneg %p48
      %p55 = scmp.eq.s32.totalorder %s16, 7
      %p56 = por %p54, %p55
      %p57 = scmp.ne.s32.totalorder %s49, %s52
      %p58 = scmp.eq.s32.totalorder %s16, 0
      %p59 = por %p57, %p58
      %p60 = scmp.ne.s32.totalorder %s49, %s52
      %p61 = scmp.eq.s32.totalorder %s21, 7
      %p62 = por %p60, %p61
      %p63 = scmp.ne.s32.totalorder %s52, %s53
      %p64 = scmp.eq.s32.totalorder %s21, 0
      %p65 = por %p63, %p64
      %p66 = scmp.ne.s32.totalorder %s52, %s53
      %p67 = scmp.eq.s32.totalorder %s22, 7
      %p68 = por %p66, %p67
      %p70 = scmp.ne.s32.totalorder %s53, %s69
      %p71 = scmp.eq.s32.totalorder %s22, 0
      %p72 = por %p70, %p71
      %s73 = ssub.s32 %s25, %s34
      %p74 = scmp.eq.s32.totalorder %s73, 0
      %s76 = sadd.s32 %s75, 1
      %s77 = scalar_select %p74, %s75, %s76
      %p80 = pneg %p74
      %p81 = scmp.eq.s32.totalorder %s16, 7
      %p82 = por %p80, %p81
      %p83 = scmp.ne.s32.totalorder %s75, %s78
      %p84 = scmp.eq.s32.totalorder %s16, 0
      %p85 = por %p83, %p84
      %p86 = scmp.ne.s32.totalorder %s75, %s78
      %p87 = scmp.eq.s32.totalorder %s21, 7
      %p88 = por %p86, %p87
      %p89 = scmp.ne.s32.totalorder %s78, %s79
      %p90 = scmp.eq.s32.totalorder %s21, 0
      %p91 = por %p89, %p90
      %p92 = scmp.ne.s32.totalorder %s78, %s79
      %p93 = scmp.eq.s32.totalorder %s22, 7
      %p94 = por %p92, %p93
      %p96 = scmp.ne.s32.totalorder %s79, %s95
      %p97 = scmp.eq.s32.totalorder %s22, 0
      %p98 = por %p96, %p97
      %s99 = ssub.s32 %s25, %s34
      %p100 = scmp.eq.s32.totalorder %s99, 0
      %s102 = sadd.s32 %s101, 1
      %s103 = scalar_select %p100, %s101, %s102
      %p106 = pneg %p100
      %p107 = scmp.eq.s32.totalorder %s16, 7
      %p108 = por %p106, %p107
      %p109 = scmp.ne.s32.totalorder %s101, %s104
      %p110 = scmp.eq.s32.totalorder %s16, 0
      %p111 = por %p109, %p110
      %p112 = scmp.ne.s32.totalorder %s101, %s104
      %p113 = scmp.eq.s32.totalorder %s21, 7
      %p114 = por %p112, %p113
      %p115 = scmp.ne.s32.totalorder %s104, %s105
      %p116 = scmp.eq.s32.totalorder %s21, 0
      %p117 = por %p115, %p116
      %p118 = scmp.ne.s32.totalorder %s104, %s105
      %p119 = scmp.eq.s32.totalorder %s22, 7
      %p120 = por %p118, %p119
      %p122 = scmp.ne.s32.totalorder %s105, %s121
      %p123 = scmp.eq.s32.totalorder %s22, 0
      %p124 = por %p122, %p123
      %s125 = ssub.s32 %s23, %s42
      %s126 = ssub.s32 %s25, %s34
      %s127 = sor.u32 %s125, %s126
      %s128 = ssub.s32 %s24, %s38
      %s129 = sor.u32 %s127, %s128
      %p130 = scmp.eq.s32.totalorder %s129, 0
      %s132 = sadd.s32 %s131, 1
      %s133 = scalar_select %p130, %s131, %s132
      %p136 = pneg %p130
      %p137 = scmp.eq.s32.totalorder %s16, 7
      %p138 = por %p136, %p137
      %p139 = scmp.ne.s32.totalorder %s131, %s134
      %p140 = scmp.eq.s32.totalorder %s16, 0
      %p141 = por %p139, %p140
      %p142 = scmp.ne.s32.totalorder %s131, %s134
      %p143 = scmp.eq.s32.totalorder %s21, 7
      %p144 = por %p142, %p143
      %p145 = scmp.ne.s32.totalorder %s134, %s135
      %p146 = scmp.eq.s32.totalorder %s21, 0
      %p147 = por %p145, %p146
      %p148 = scmp.ne.s32.totalorder %s134, %s135
      %p149 = scmp.eq.s32.totalorder %s22, 7
      %p150 = por %p148, %p149
      %p152 = scmp.ne.s32.totalorder %s135, %s151
      %p153 = scmp.eq.s32.totalorder %s22, 0
      %p154 = por %p152, %p153
      %p155 = scmp.le.s32.totalorder 1, %s16
      %p156 = scmp.lt.s32.totalorder %s16, 9
      %p157 = pnand %p155, %p156
      %p158 = pneg %p157
      // Predicated region
      $region9: #{tpu_custom_call.1} parent=5 // pred_check
        _
      $region10: #{tpu_custom_call.1} parent=5 // pred_check_branch
        %160 = sbr.rel (%p157) target = $region12
      $region11: #{tpu_custom_call.1} parent=5 // pred_region
        %s161 = ssub.s32 %s16, 1
        // Predicated region
        $region13: #{tpu_custom_call.1} parent=11 // pred_check
          %p162 = pneg %p91
        $region14: #{tpu_custom_call.1} parent=11 // pred_check_branch
          %164 = sbr.rel (%p162) target = $region16
        $region15: #{tpu_custom_call.1} parent=11 // pred_region
          %s165 = smul.u32 32, %s28
          %s167 = ssub.s32 4096, 4096
          %168 = vsyncadd [#allocation6], %s167
          %s169 = smul.addr %s165, 128
          %s170 = scalar_lea.hbm %s1, %s169
          %s171 = sshll.u32 [#allocation5], 4
          %s172 = int_to_ptr.vmem [resolvable:$true] %s171
          %177 = dma.hbm_to_vmem [thread:$0]  %s170, 4096, %s172, [#allocation6], 128, 128, 8
        $region16: #{tpu_custom_call.1} parent=11 // pred_fallthru
          _
        // Predicated region
        $region17: #{tpu_custom_call.1} parent=11 // pred_check
          %p178 = pneg %p117
        $region18: #{tpu_custom_call.1} parent=11 // pred_check_branch
          %180 = sbr.rel (%p178) target = $region20
        $region19: #{tpu_custom_call.1} parent=11 // pred_region
          %s181 = smul.u32 32, %s28
          %s183 = ssub.s32 4096, 4096
          %184 = vsyncadd [#allocation6], %s183
          %s185 = smul.addr %s181, 128
          %s186 = scalar_lea.hbm %s2, %s185
          %s187 = sshll.u32 [#allocation7], 4
          %s188 = int_to_ptr.vmem [resolvable:$true] %s187
          %193 = dma.hbm_to_vmem [thread:$0]  %s186, 4096, %s188, [#allocation6], 128, 128, 8
        $region20: #{tpu_custom_call.1} parent=11 // pred_fallthru
          _
      $region12: #{tpu_custom_call.1} parent=5 // pred_fallthru
        _
      %p194 = scmp.lt.s32.totalorder %s16, 8
      // Predicated region
      $region21: #{tpu_custom_call.1} parent=5 // pred_check
        %p195 = pneg %p194
      $region22: #{tpu_custom_call.1} parent=5 // pred_check_branch
        %197 = sbr.rel (%p195) target = $region24
      $region23: #{tpu_custom_call.1} parent=5 // pred_region
        // Predicated region
        $region25: #{tpu_custom_call.1} parent=23 // pred_check
          %p198 = pneg %p59
        $region26: #{tpu_custom_call.1} parent=23 // pred_check_branch
          %200 = sbr.rel (%p198) target = $region28
        $region27: #{tpu_custom_call.1} parent=23 // pred_region
          %s201 = sand.u32 %s49, 1
          %s202 = scalar_lea.sflag [#allocation3], %s201
          %s203 = sand.u32 %s49, 1
          %s204 = smul.addr %s203, 256
          %s205 = scalar_lea.vmem [#allocation2], %s204
          %s206 = smul.u32 32, %s25
          %s208 = ssub.s32 4096, 4096
          %209 = vsyncadd %s202, %s208
          %s210 = smul.addr %s206, 4
          %s211 = sadd.s32 %s24, %s210
          %s212 = smul.addr %s23, 128
          %s213 = sadd.s32 %s211, %s212
          %s214 = smul.addr %s213, 128
          %s215 = scalar_lea.hbm %s0, %s214
          %s216 = sshll.u32 %s205, 4
          %s217 = int_to_ptr.vmem [resolvable:$true] %s216
          %222 = dma.hbm_to_vmem [thread:$0]  %s215, 4096, %s217, %s202, 512, 128, 8
        $region28: #{tpu_custom_call.1} parent=23 // pred_fallthru
          _
      $region24: #{tpu_custom_call.1} parent=5 // pred_fallthru
        _
      %p223 = scmp.le.s32.totalorder 1, %s16
      %p224 = scmp.lt.s32.totalorder %s16, 9
      %p225 = pnand %p223, %p224
      %p226 = pneg %p225
      // Predicated region
      $region29: #{tpu_custom_call.1} parent=5 // pred_check
        _
      $region30: #{tpu_custom_call.1} parent=5 // pred_check_branch
        %228 = sbr.rel (%p225) target = $region32
      $region31: #{tpu_custom_call.1} parent=5 // pred_region
        %s229 = ssub.s32 %s16, 1
        %s230 = sand.u32 %s52, 1
        %s231 = scalar_lea.sflag [#allocation3], %s230
        %s232 = sand.u32 %s52, 1
        %s233 = smul.addr %s232, 256
        %s234 = scalar_lea.vmem [#allocation2], %s233
        // Predicated region
        $region33: #{tpu_custom_call.1} parent=31 // pred_check
          %p235 = pneg %p65
        $region34: #{tpu_custom_call.1} parent=31 // pred_check_branch
          %237 = sbr.rel (%p235) target = $region36
        $region35: #{tpu_custom_call.1} parent=31 // pred_region
          %238 = dma.done %s231, 4096
        $region36: #{tpu_custom_call.1} parent=31 // pred_fallthru
          _
        // Predicated region
        $region37: #{tpu_custom_call.1} parent=31 // pred_check
          %p239 = pneg %p91
        $region38: #{tpu_custom_call.1} parent=31 // pred_check_branch
          %241 = sbr.rel (%p239) target = $region40
        $region39: #{tpu_custom_call.1} parent=31 // pred_region
          %242 = dma.done [#allocation6], 4096
        $region40: #{tpu_custom_call.1} parent=31 // pred_fallthru
          _
        // Predicated region
        $region41: #{tpu_custom_call.1} parent=31 // pred_check
          %p243 = pneg %p117
        $region42: #{tpu_custom_call.1} parent=31 // pred_check_branch
          %245 = sbr.rel (%p243) target = $region44
        $region43: #{tpu_custom_call.1} parent=31 // pred_region
          %246 = dma.done [#allocation6], 4096
        $region44: #{tpu_custom_call.1} parent=31 // pred_fallthru
          _
        %s247 = sand.u32 %s52, 1
        %s248 = scalar_lea.sflag [#allocation3], %s247
        %s249 = sand.u32 %s52, 1
        %s250 = smul.addr %s249, 256
        %s251 = scalar_lea.vmem [#allocation2], %s250
        %p252 = pneg %p65
        %p253 = pneg %p62
        %p254 = pneg %p91
        %p255 = pneg %p88
        %p256 = pneg %p117
        %p257 = pneg %p114
        %p258 = pneg %p147
        %p259 = pneg %p144
        %s260 = sand.u32 %s134, 1
        %s261 = scalar_lea.sflag [#allocation4], %s260
        %s262 = sand.u32 %s134, 1
        %s263 = smul.addr %s262, 256
        %s264 = scalar_lea.vmem [#allocation8], %s263
        %s265 = smul.u32 32, %s28
        %s266 = smul.u32 32, %s28
        %s267 = smul.u32 32, %s28
        %s268 = smul.u32 32, %s28
        %v269 = vld [vmem:[%s234] sm:$0xff]
        %v270 = vld [vmem:[%s234 + $0x8] sm:$0xff]
        %v271 = vld [vmem:[%s234 + $0x10] sm:$0xff]
        %v272 = vld [vmem:[%s234 + $0x18] sm:$0xff]
        %v273 = vld [vmem:[%s234 + $0x20] sm:$0xff]
        %v274 = vld [vmem:[%s234 + $0x28] sm:$0xff]
        %v275 = vld [vmem:[%s234 + $0x30] sm:$0xff]
        %v276 = vld [vmem:[%s234 + $0x38] sm:$0xff]
        %v277 = vld [vmem:[%s234 + $0x40] sm:$0xff]
        %v278 = vld [vmem:[%s234 + $0x48] sm:$0xff]
        %v279 = vld [vmem:[%s234 + $0x50] sm:$0xff]
        %v280 = vld [vmem:[%s234 + $0x58] sm:$0xff]
        %v281 = vld [vmem:[%s234 + $0x60] sm:$0xff]
        %v282 = vld [vmem:[%s234 + $0x68] sm:$0xff]
        %v283 = vld [vmem:[%s234 + $0x70] sm:$0xff]
        %v284 = vld [vmem:[%s234 + $0x78] sm:$0xff]
        %v285 = vld [vmem:[%s234 + $0x80] sm:$0xff]
        %v286 = vld [vmem:[%s234 + $0x88] sm:$0xff]
        %v287 = vld [vmem:[%s234 + $0x90] sm:$0xff]
        %v288 = vld [vmem:[%s234 + $0x98] sm:$0xff]
        %v289 = vld [vmem:[%s234 + $0xa0] sm:$0xff]
        %v290 = vld [vmem:[%s234 + $0xa8] sm:$0xff]
        %v291 = vld [vmem:[%s234 + $0xb0] sm:$0xff]
        %v292 = vld [vmem:[%s234 + $0xb8] sm:$0xff]
        %v293 = vld [vmem:[%s234 + $0xc0] sm:$0xff]
        %v294 = vld [vmem:[%s234 + $0xc8] sm:$0xff]
        %v295 = vld [vmem:[%s234 + $0xd0] sm:$0xff]
        %v296 = vld [vmem:[%s234 + $0xd8] sm:$0xff]
        %v297 = vld [vmem:[%s234 + $0xe0] sm:$0xff]
        %v298 = vld [vmem:[%s234 + $0xe8] sm:$0xff]
        %v299 = vld [vmem:[%s234 + $0xf0] sm:$0xff]
        %v300 = vld [vmem:[%s234 + $0xf8] sm:$0xff]
        %301 = vrot.lane.b32.xlu0 %v269, 64
        %v302 = vpop.permute.xlu0 %301
        %303 = vrot.lane.b32.xlu0 %v270, 64
        %v304 = vpop.permute.xlu0 %303
        %305 = vrot.lane.b32.xlu0 %v271, 64
        %v306 = vpop.permute.xlu0 %305
        %307 = vrot.lane.b32.xlu0 %v272, 64
        %v308 = vpop.permute.xlu0 %307
        %309 = vrot.lane.b32.xlu0 %v273, 64
        %v310 = vpop.permute.xlu0 %309
        %311 = vrot.lane.b32.xlu0 %v274, 64
        %v312 = vpop.permute.xlu0 %311
        %313 = vrot.lane.b32.xlu0 %v275, 64
        %v314 = vpop.permute.xlu0 %313
        %315 = vrot.lane.b32.xlu0 %v276, 64
        %v316 = vpop.permute.xlu0 %315
        %317 = vrot.lane.b32.xlu0 %v277, 64
        %v318 = vpop.permute.xlu0 %317
        %319 = vrot.lane.b32.xlu0 %v278, 64
        %v320 = vpop.permute.xlu0 %319
        %321 = vrot.lane.b32.xlu0 %v279, 64
        %v322 = vpop.permute.xlu0 %321
        %323 = vrot.lane.b32.xlu0 %v280, 64
        %v324 = vpop.permute.xlu0 %323
        %325 = vrot.lane.b32.xlu0 %v281, 64
        %v326 = vpop.permute.xlu0 %325
        %327 = vrot.lane.b32.xlu0 %v282, 64
        %v328 = vpop.permute.xlu0 %327
        %329 = vrot.lane.b32.xlu0 %v283, 64
        %v330 = vpop.permute.xlu0 %329
        %331 = vrot.lane.b32.xlu0 %v284, 64
        %v332 = vpop.permute.xlu0 %331
        %333 = vrot.lane.b32.xlu0 %v285, 64
        %v334 = vpop.permute.xlu0 %333
        %335 = vrot.lane.b32.xlu0 %v286, 64
        %v336 = vpop.permute.xlu0 %335
        %337 = vrot.lane.b32.xlu0 %v287, 64
        %v338 = vpop.permute.xlu0 %337
        %339 = vrot.lane.b32.xlu0 %v288, 64
        %v340 = vpop.permute.xlu0 %339
        %341 = vrot.lane.b32.xlu0 %v289, 64
        %v342 = vpop.permute.xlu0 %341
        %343 = vrot.lane.b32.xlu0 %v290, 64
        %v344 = vpop.permute.xlu0 %343
        %345 = vrot.lane.b32.xlu0 %v291, 64
        %v346 = vpop.permute.xlu0 %345
        %347 = vrot.lane.b32.xlu0 %v292, 64
        %v348 = vpop.permute.xlu0 %347
        %349 = vrot.lane.b32.xlu0 %v293, 64
        %v350 = vpop.permute.xlu0 %349
        %351 = vrot.lane.b32.xlu0 %v294, 64
        %v352 = vpop.permute.xlu0 %351
        %353 = vrot.lane.b32.xlu0 %v295, 64
        %v354 = vpop.permute.xlu0 %353
        %355 = vrot.lane.b32.xlu0 %v296, 64
        %v356 = vpop.permute.xlu0 %355
        %357 = vrot.lane.b32.xlu0 %v297, 64
        %v358 = vpop.permute.xlu0 %357
        %359 = vrot.lane.b32.xlu0 %v298, 64
        %v360 = vpop.permute.xlu0 %359
        %361 = vrot.lane.b32.xlu0 %v299, 64
        %v362 = vpop.permute.xlu0 %361
        %363 = vrot.lane.b32.xlu0 %v300, 64
        %v364 = vpop.permute.xlu0 %363
        %v365 = vld [vmem:[#allocation5] sm:$0xff]
        %v366 = vld [vmem:[#allocation5 + $0x8] sm:$0xff]
        %v367 = vld [vmem:[#allocation5 + $0x10] sm:$0xff]
        %v368 = vld [vmem:[#allocation5 + $0x18] sm:$0xff]
        %v369 = vld [vmem:[#allocation5 + $0x20] sm:$0xff]
        %v370 = vld [vmem:[#allocation5 + $0x28] sm:$0xff]
        %v371 = vld [vmem:[#allocation5 + $0x30] sm:$0xff]
        %v372 = vld [vmem:[#allocation5 + $0x38] sm:$0xff]
        %v373 = vld [vmem:[#allocation5 + $0x40] sm:$0xff]
        %v374 = vld [vmem:[#allocation5 + $0x48] sm:$0xff]
        %v375 = vld [vmem:[#allocation5 + $0x50] sm:$0xff]
        %v376 = vld [vmem:[#allocation5 + $0x58] sm:$0xff]
        %v377 = vld [vmem:[#allocation5 + $0x60] sm:$0xff]
        %v378 = vld [vmem:[#allocation5 + $0x68] sm:$0xff]
        %v379 = vld [vmem:[#allocation5 + $0x70] sm:$0xff]
        %v380 = vld [vmem:[#allocation5 + $0x78] sm:$0xff]
        %v381 = vld [vmem:[#allocation5 + $0x80] sm:$0xff]
        %v382 = vld [vmem:[#allocation5 + $0x88] sm:$0xff]
        %v383 = vld [vmem:[#allocation5 + $0x90] sm:$0xff]
        %v384 = vld [vmem:[#allocation5 + $0x98] sm:$0xff]
        %v385 = vld [vmem:[#allocation5 + $0xa0] sm:$0xff]
        %v386 = vld [vmem:[#allocation5 + $0xa8] sm:$0xff]
        %v387 = vld [vmem:[#allocation5 + $0xb0] sm:$0xff]
        %v388 = vld [vmem:[#allocation5 + $0xb8] sm:$0xff]
        %v389 = vld [vmem:[#allocation5 + $0xc0] sm:$0xff]
        %v390 = vld [vmem:[#allocation5 + $0xc8] sm:$0xff]
        %v391 = vld [vmem:[#allocation5 + $0xd0] sm:$0xff]
        %v392 = vld [vmem:[#allocation5 + $0xd8] sm:$0xff]
        %v393 = vld [vmem:[#allocation5 + $0xe0] sm:$0xff]
        %v394 = vld [vmem:[#allocation5 + $0xe8] sm:$0xff]
        %v395 = vld [vmem:[#allocation5 + $0xf0] sm:$0xff]
        %v396 = vld [vmem:[#allocation5 + $0xf8] sm:$0xff]
        %v397 = vmul.f32 %v269, %v365
        %v398 = vmul.f32 %v270, %v366
        %v399 = vmul.f32 %v271, %v367
        %v400 = vmul.f32 %v272, %v368
        %v401 = vmul.f32 %v273, %v369
        %v402 = vmul.f32 %v274, %v370
        %v403 = vmul.f32 %v275, %v371
        %v404 = vmul.f32 %v276, %v372
        %v405 = vmul.f32 %v277, %v373
        %v406 = vmul.f32 %v278, %v374
        %v407 = vmul.f32 %v279, %v375
        %v408 = vmul.f32 %v280, %v376
        %v409 = vmul.f32 %v281, %v377
        %v410 = vmul.f32 %v282, %v378
        %v411 = vmul.f32 %v283, %v379
        %v412 = vmul.f32 %v284, %v380
        %v413 = vmul.f32 %v285, %v381
        %v414 = vmul.f32 %v286, %v382
        %v415 = vmul.f32 %v287, %v383
        %v416 = vmul.f32 %v288, %v384
        %v417 = vmul.f32 %v289, %v385
        %v418 = vmul.f32 %v290, %v386
        %v419 = vmul.f32 %v291, %v387
        %v420 = vmul.f32 %v292, %v388
        %v421 = vmul.f32 %v293, %v389
        %v422 = vmul.f32 %v294, %v390
        %v423 = vmul.f32 %v295, %v391
        %v424 = vmul.f32 %v296, %v392
        %v425 = vmul.f32 %v297, %v393
        %v426 = vmul.f32 %v298, %v394
        %v427 = vmul.f32 %v299, %v395
        %v428 = vmul.f32 %v300, %v396
        %v429 = vld [vmem:[#allocation7] sm:$0xff]
        %v430 = vld [vmem:[#allocation7 + $0x8] sm:$0xff]
        %v431 = vld [vmem:[#allocation7 + $0x10] sm:$0xff]
        %v432 = vld [vmem:[#allocation7 + $0x18] sm:$0xff]
        %v433 = vld [vmem:[#allocation7 + $0x20] sm:$0xff]
        %v434 = vld [vmem:[#allocation7 + $0x28] sm:$0xff]
        %v435 = vld [vmem:[#allocation7 + $0x30] sm:$0xff]
        %v436 = vld [vmem:[#allocation7 + $0x38] sm:$0xff]
        %v437 = vld [vmem:[#allocation7 + $0x40] sm:$0xff]
        %v438 = vld [vmem:[#allocation7 + $0x48] sm:$0xff]
        %v439 = vld [vmem:[#allocation7 + $0x50] sm:$0xff]
        %v440 = vld [vmem:[#allocation7 + $0x58] sm:$0xff]
        %v441 = vld [vmem:[#allocation7 + $0x60] sm:$0xff]
        %v442 = vld [vmem:[#allocation7 + $0x68] sm:$0xff]
        %v443 = vld [vmem:[#allocation7 + $0x70] sm:$0xff]
        %v444 = vld [vmem:[#allocation7 + $0x78] sm:$0xff]
        %v445 = vld [vmem:[#allocation7 + $0x80] sm:$0xff]
        %v446 = vld [vmem:[#allocation7 + $0x88] sm:$0xff]
        %v447 = vld [vmem:[#allocation7 + $0x90] sm:$0xff]
        %v448 = vld [vmem:[#allocation7 + $0x98] sm:$0xff]
        %v449 = vld [vmem:[#allocation7 + $0xa0] sm:$0xff]
        %v450 = vld [vmem:[#allocation7 + $0xa8] sm:$0xff]
        %v451 = vld [vmem:[#allocation7 + $0xb0] sm:$0xff]
        %v452 = vld [vmem:[#allocation7 + $0xb8] sm:$0xff]
        %v453 = vld [vmem:[#allocation7 + $0xc0] sm:$0xff]
        %v454 = vld [vmem:[#allocation7 + $0xc8] sm:$0xff]
        %v455 = vld [vmem:[#allocation7 + $0xd0] sm:$0xff]
        %v456 = vld [vmem:[#allocation7 + $0xd8] sm:$0xff]
        %v457 = vld [vmem:[#allocation7 + $0xe0] sm:$0xff]
        %v458 = vld [vmem:[#allocation7 + $0xe8] sm:$0xff]
        %v459 = vld [vmem:[#allocation7 + $0xf0] sm:$0xff]
        %v460 = vld [vmem:[#allocation7 + $0xf8] sm:$0xff]
        %v461 = vmul.f32 %v302, %v429
        %v462 = vmul.f32 %v304, %v430
        %v463 = vmul.f32 %v306, %v431
        %v464 = vmul.f32 %v308, %v432
        %v465 = vmul.f32 %v310, %v433
        %v466 = vmul.f32 %v312, %v434
        %v467 = vmul.f32 %v314, %v435
        %v468 = vmul.f32 %v316, %v436
        %v469 = vmul.f32 %v318, %v437
        %v470 = vmul.f32 %v320, %v438
        %v471 = vmul.f32 %v322, %v439
        %v472 = vmul.f32 %v324, %v440
        %v473 = vmul.f32 %v326, %v441
        %v474 = vmul.f32 %v328, %v442
        %v475 = vmul.f32 %v330, %v443
        %v476 = vmul.f32 %v332, %v444
        %v477 = vmul.f32 %v334, %v445
        %v478 = vmul.f32 %v336, %v446
        %v479 = vmul.f32 %v338, %v447
        %v480 = vmul.f32 %v340, %v448
        %v481 = vmul.f32 %v342, %v449
        %v482 = vmul.f32 %v344, %v450
        %v483 = vmul.f32 %v346, %v451
        %v484 = vmul.f32 %v348, %v452
        %v485 = vmul.f32 %v350, %v453
        %v486 = vmul.f32 %v352, %v454
        %v487 = vmul.f32 %v354, %v455
        %v488 = vmul.f32 %v356, %v456
        %v489 = vmul.f32 %v358, %v457
        %v490 = vmul.f32 %v360, %v458
        %v491 = vmul.f32 %v362, %v459
        %v492 = vmul.f32 %v364, %v460
        %v493 = vadd.f32 %v397, %v461
        %v494 = vadd.f32 %v398, %v462
        %v495 = vadd.f32 %v399, %v463
        %v496 = vadd.f32 %v400, %v464
        %v497 = vadd.f32 %v401, %v465
        %v498 = vadd.f32 %v402, %v466
        %v499 = vadd.f32 %v403, %v467
        %v500 = vadd.f32 %v404, %v468
        %v501 = vadd.f32 %v405, %v469
        %v502 = vadd.f32 %v406, %v470
        %v503 = vadd.f32 %v407, %v471
        %v504 = vadd.f32 %v408, %v472
        %v505 = vadd.f32 %v409, %v473
        %v506 = vadd.f32 %v410, %v474
        %v507 = vadd.f32 %v411, %v475
        %v508 = vadd.f32 %v412, %v476
        %v509 = vadd.f32 %v413, %v477
        %v510 = vadd.f32 %v414, %v478
        %v511 = vadd.f32 %v415, %v479
        %v512 = vadd.f32 %v416, %v480
        %v513 = vadd.f32 %v417, %v481
        %v514 = vadd.f32 %v418, %v482
        %v515 = vadd.f32 %v419, %v483
        %v516 = vadd.f32 %v420, %v484
        %v517 = vadd.f32 %v421, %v485
        %v518 = vadd.f32 %v422, %v486
        %v519 = vadd.f32 %v423, %v487
        %v520 = vadd.f32 %v424, %v488
        %v521 = vadd.f32 %v425, %v489
        %v522 = vadd.f32 %v426, %v490
        %v523 = vadd.f32 %v427, %v491
        %v524 = vadd.f32 %v428, %v492
        %v525 = vmul.f32 %v493, 0.088388346
        %v526 = vmul.f32 %v494, 0.088388346
        %v527 = vmul.f32 %v495, 0.088388346
        %v528 = vmul.f32 %v496, 0.088388346
        %v529 = vmul.f32 %v497, 0.088388346
        %v530 = vmul.f32 %v498, 0.088388346
        %v531 = vmul.f32 %v499, 0.088388346
        %v532 = vmul.f32 %v500, 0.088388346
        %v533 = vmul.f32 %v501, 0.088388346
        %v534 = vmul.f32 %v502, 0.088388346
        %v535 = vmul.f32 %v503, 0.088388346
        %v536 = vmul.f32 %v504, 0.088388346
        %v537 = vmul.f32 %v505, 0.088388346
        %v538 = vmul.f32 %v506, 0.088388346
        %v539 = vmul.f32 %v507, 0.088388346
        %v540 = vmul.f32 %v508, 0.088388346
        %v541 = vmul.f32 %v509, 0.088388346
        %v542 = vmul.f32 %v510, 0.088388346
        %v543 = vmul.f32 %v511, 0.088388346
        %v544 = vmul.f32 %v512, 0.088388346
        %v545 = vmul.f32 %v513, 0.088388346
        %v546 = vmul.f32 %v514, 0.088388346
        %v547 = vmul.f32 %v515, 0.088388346
        %v548 = vmul.f32 %v516, 0.088388346
        %v549 = vmul.f32 %v517, 0.088388346
        %v550 = vmul.f32 %v518, 0.088388346
        %v551 = vmul.f32 %v519, 0.088388346
        %v552 = vmul.f32 %v520, 0.088388346
        %v553 = vmul.f32 %v521, 0.088388346
        %v554 = vmul.f32 %v522, 0.088388346
        %v555 = vmul.f32 %v523, 0.088388346
        %v556 = vmul.f32 %v524, 0.088388346
        %557 = vst [vmem:[%s264] sm:$0xff] %v525
        %558 = vst [vmem:[%s264 + $0x8] sm:$0xff] %v526
        %559 = vst [vmem:[%s264 + $0x10] sm:$0xff] %v527
        %560 = vst [vmem:[%s264 + $0x18] sm:$0xff] %v528
        %561 = vst [vmem:[%s264 + $0x20] sm:$0xff] %v529
        %562 = vst [vmem:[%s264 + $0x28] sm:$0xff] %v530
        %563 = vst [vmem:[%s264 + $0x30] sm:$0xff] %v531
        %564 = vst [vmem:[%s264 + $0x38] sm:$0xff] %v532
        %565 = vst [vmem:[%s264 + $0x40] sm:$0xff] %v533
        %566 = vst [vmem:[%s264 + $0x48] sm:$0xff] %v534
        %567 = vst [vmem:[%s264 + $0x50] sm:$0xff] %v535
        %568 = vst [vmem:[%s264 + $0x58] sm:$0xff] %v536
        %569 = vst [vmem:[%s264 + $0x60] sm:$0xff] %v537
        %570 = vst [vmem:[%s264 + $0x68] sm:$0xff] %v538
        %571 = vst [vmem:[%s264 + $0x70] sm:$0xff] %v539
        %572 = vst [vmem:[%s264 + $0x78] sm:$0xff] %v540
        %573 = vst [vmem:[%s264 + $0x80] sm:$0xff] %v541
        %574 = vst [vmem:[%s264 + $0x88] sm:$0xff] %v542
        %575 = vst [vmem:[%s264 + $0x90] sm:$0xff] %v543
        %576 = vst [vmem:[%s264 + $0x98] sm:$0xff] %v544
        %577 = vst [vmem:[%s264 + $0xa0] sm:$0xff] %v545
        %578 = vst [vmem:[%s264 + $0xa8] sm:$0xff] %v546
        %579 = vst [vmem:[%s264 + $0xb0] sm:$0xff] %v547
        %580 = vst [vmem:[%s264 + $0xb8] sm:$0xff] %v548
        %581 = vst [vmem:[%s264 + $0xc0] sm:$0xff] %v549
        %582 = vst [vmem:[%s264 + $0xc8] sm:$0xff] %v550
        %583 = vst [vmem:[%s264 + $0xd0] sm:$0xff] %v551
        %584 = vst [vmem:[%s264 + $0xd8] sm:$0xff] %v552
        %585 = vst [vmem:[%s264 + $0xe0] sm:$0xff] %v553
        %586 = vst [vmem:[%s264 + $0xe8] sm:$0xff] %v554
        %587 = vst [vmem:[%s264 + $0xf0] sm:$0xff] %v555
        %588 = vst [vmem:[%s264 + $0xf8] sm:$0xff] %v556
        %s589 = sand.u32 %s134, 1
        %s590 = scalar_lea.sflag [#allocation4], %s589
        %s591 = sand.u32 %s134, 1
        %s592 = smul.addr %s591, 256
        %s593 = scalar_lea.vmem [#allocation8], %s592
        // Predicated region
        $region45: #{tpu_custom_call.1} parent=31 // pred_check
          %p594 = pneg %p144
        $region46: #{tpu_custom_call.1} parent=31 // pred_check_branch
          %596 = sbr.rel (%p594) target = $region48
        $region47: #{tpu_custom_call.1} parent=31 // pred_region
          %s597 = smul.u32 32, %s28
          %s599 = ssub.s32 4096, 4096
          %600 = vsyncadd %s590, %s599
          %s601 = smul.addr %s597, 4
          %s602 = sadd.s32 %s27, %s601
          %s603 = smul.addr %s26, 128
          %s604 = sadd.s32 %s602, %s603
          %s605 = smul.addr %s604, 128
          %s606 = scalar_lea.hbm %s3, %s605
          %s607 = sshll.u32 %s593, 4
          %s608 = int_to_ptr.vmem [resolvable:$true] %s607
          %613 = dma.vmem_to_hbm [thread:$0]  %s608, 4096, %s606, %s590, 128, 512, 8
        $region48: #{tpu_custom_call.1} parent=31 // pred_fallthru
          _
      $region32: #{tpu_custom_call.1} parent=5 // pred_fallthru
        _
      %p614 = scmp.le.s32.totalorder 2, %s16
      // Predicated region
      $region49: #{tpu_custom_call.1} parent=5 // pred_check
        %p615 = pneg %p614
      $region50: #{tpu_custom_call.1} parent=5 // pred_check_branch
        %617 = sbr.rel (%p615) target = $region52
      $region51: #{tpu_custom_call.1} parent=5 // pred_region
        %s618 = ssub.s32 %s16, 2
        // Predicated region
        $region53: #{tpu_custom_call.1} parent=51 // pred_check
          %p619 = pneg %p150
        $region54: #{tpu_custom_call.1} parent=51 // pred_check_branch
          %621 = sbr.rel (%p619) target = $region56
        $region55: #{tpu_custom_call.1} parent=51 // pred_region
          %s622 = sand.u32 %s135, 1
          %s623 = scalar_lea.sflag [#allocation4], %s622
          %s624 = sand.u32 %s135, 1
          %s625 = smul.addr %s624, 256
          %s626 = scalar_lea.vmem [#allocation8], %s625
          %627 = dma.done %s623, 4096
        $region56: #{tpu_custom_call.1} parent=51 // pred_fallthru
          _
      $region52: #{tpu_custom_call.1} parent=5 // pred_fallthru
        _
    $region6: #{tpu_custom_call.1} parent=1 // loop_footer
      %s20 = sadd.s32 1, %s16
    $region7: #{tpu_custom_call.1} parent=1 // loop_footer_branch
      %15 = sbr.rel target = $region3
    $region8: #{tpu_custom_call.1} parent=1 // loop_exit
      _
    %628 = vsyncpa [#allocation3], 1
    %s629 = scalar_lea.sflag [#allocation3], 1
    %630 = vsyncpa %s629, 1
    %631 = vsyncpa [#allocation6], 1
    %632 = vsyncpa [#allocation4], 1
    %s633 = scalar_lea.sflag [#allocation4], 1
    %634 = vsyncpa %s633, 1

</llo_original>
